<compile_context>
chip_gen: v7x
topology: tpu7x:2x2x1
jax: 0.10.0
libtpu: 0.0.40
codegen_flags: <defaults>
</compile_context>

<pallas_src>
import functools

import jax
import jax.numpy as jnp
from jax.experimental import pallas as pl
from jax.experimental.pallas import tpu as pltpu

EPS = 1e-5
LANE = 128


def _round_up(n, m):
    return (n + m - 1) // m * m


def _bn_relu(h, gamma, beta):
    # Training-mode BatchNorm1d: batch mean / biased variance over axis 0 (f32).
    mu = jnp.mean(h, axis=0, keepdims=True)
    ex2 = jnp.mean(h * h, axis=0, keepdims=True)
    var = jnp.maximum(ex2 - mu * mu, 0.0)   # clamp: f32 cancellation at small batch
    inv = jax.lax.rsqrt(var + EPS)          # EUP slot (otherwise idle here)
    return jnp.maximum(gamma * (h - mu) * inv + beta, 0.0)


def mlp_kernel(x_ref, w1_ref, w2_ref, w3_ref, vecs_ref, o_ref, *, hidden2):
    out_pad = o_ref.shape[1]

    # Packed per-feature vectors, one (5, hidden) f32 VMEM tile:
    #   row 0: gamma1 (hidden)          row 1: beta1 (hidden)
    #   row 2: gamma2 (hidden2, padded) row 3: beta2 (hidden2, padded)
    #   row 4: b3 (out_pad, padded)
    g1 = vecs_ref[0:1, :]
    be1 = vecs_ref[1:2, :]
    g2 = vecs_ref[2:3, :hidden2]
    be2 = vecs_ref[3:4, :hidden2]
    b3 = vecs_ref[4:5, :out_pad]

    # fc1 (+ bn1 + relu). b1 is exactly cancelled by the BN mean subtraction.
    x = x_ref[...].astype(jnp.bfloat16)            # bf16 MXU input, f32 accumulate
    h1 = jnp.dot(x, w1_ref[...], preferred_element_type=jnp.float32)
    h1 = _bn_relu(h1, g1, be1)

    # fc2 (+ bn2 + relu). b2 cancels as above.
    h2 = jnp.dot(h1.astype(jnp.bfloat16), w2_ref[...],
                 preferred_element_type=jnp.float32)
    h2 = _bn_relu(h2, g2, be2)

    # fc3 (bias kept).
    out = jnp.dot(h2.astype(jnp.bfloat16), w3_ref[...],
                  preferred_element_type=jnp.float32) + b3
    o_ref[...] = out.astype(o_ref.dtype)


def prepare_params(params):
    """One-time parameter prep (hoisted out of the per-call hot path):
    bf16 weight cast, lane-dense w3 column padding (50 -> 128), and packing of
    all small per-feature vectors into a single (5, hidden) f32 array."""
    (w1, b1, g1, be1, w2, b2, g2, be2, w3, b3) = params
    del b1, b2  # exactly cancelled by training-mode BN mean subtraction

    hidden = w1.shape[1]
    hidden2 = w2.shape[1]
    out_features = w3.shape[1]
    out_pad = _round_up(out_features, LANE)

    w1_bf = w1.astype(jnp.bfloat16)
    w2_bf = w2.astype(jnp.bfloat16)
    w3_p = (jnp.zeros((hidden2, out_pad), jnp.bfloat16)
            .at[:, :out_features].set(w3.astype(jnp.bfloat16)))

    vecs = jnp.zeros((5, hidden), jnp.float32)
    vecs = vecs.at[0, :].set(g1.reshape(-1))
    vecs = vecs.at[1, :].set(be1.reshape(-1))
    vecs = vecs.at[2, :hidden2].set(g2.reshape(-1))
    vecs = vecs.at[3, :hidden2].set(be2.reshape(-1))
    vecs = vecs.at[4, :out_features].set(b3.reshape(-1))

    return (w1_bf, w2_bf, w3_p, vecs), out_features


@functools.partial(jax.jit, static_argnames=("out_features",))
def nba_mlp_forward(x, prepped, out_features):
    w1, w2, w3_p, vecs = prepped
    batch = x.shape[0]
    hidden = w1.shape[1]
    hidden2 = w2.shape[1]
    out_pad = w3_p.shape[1]

    cost = pl.CostEstimate(
        flops=2 * batch * (w1.shape[0] * hidden + hidden * hidden2
                           + hidden2 * out_pad),
        transcendentals=hidden + hidden2,  # rsqrt per BN feature
        bytes_accessed=(4 * x.size + 2 * (w1.size + w2.size + w3_p.size)
                        + 4 * vecs.size + 4 * batch * out_pad),
    )

    vmem_spec = pl.BlockSpec(memory_space=pltpu.MemorySpace.VMEM)
    kernel = functools.partial(mlp_kernel, hidden2=hidden2)

    out_p = pl.pallas_call(
        kernel,
        out_shape=jax.ShapeDtypeStruct((batch, out_pad), jnp.float32),
        in_specs=[vmem_spec] * 5,
        out_specs=vmem_spec,
        cost_estimate=cost,
    )(x, w1, w2, w3_p, vecs)

    return out_p[:, :out_features]


def init_params(key, input_size=63, hidden_size=512, output_size=50):
    """Deterministic init mimicking PyTorch Linear default (U[-1/sqrt(fan_in)]),
    BatchNorm gamma=1, beta=0."""
    def linear(k, fan_in, fan_out):
        kw, kb = jax.random.split(k)
        bound = 1.0 / jnp.sqrt(fan_in)
        w = jax.random.uniform(kw, (fan_in, fan_out), jnp.float32, -bound, bound)
        b = jax.random.uniform(kb, (1, fan_out), jnp.float32, -bound, bound)
        return w, b

    k1, k2, k3 = jax.random.split(key, 3)
    w1, b1 = linear(k1, input_size, hidden_size)
    w2, b2 = linear(k2, hidden_size, hidden_size // 2)
    w3, b3 = linear(k3, hidden_size // 2, output_size)

    g1 = jnp.ones((1, hidden_size), jnp.float32)
    be1 = jnp.zeros((1, hidden_size), jnp.float32)
    g2 = jnp.ones((1, hidden_size // 2), jnp.float32)
    be2 = jnp.zeros((1, hidden_size // 2), jnp.float32)

    return (w1, b1, g1, be1, w2, b2, g2, be2, w3, b3)


def reference_forward(x, params):
    """Pure-JAX f32 reference matching the PyTorch forward (training-mode BN),
    including the b1/b2 biases (which cancel in the BN mean subtraction)."""
    (w1, b1, g1, be1, w2, b2, g2, be2, w3, b3) = params

    def bn_relu(h, g, be):
        mu = jnp.mean(h, axis=0, keepdims=True)
        var = jnp.mean((h - mu) ** 2, axis=0, keepdims=True)
        return jnp.maximum(g * (h - mu) / jnp.sqrt(var + EPS) + be, 0.0)

    h1 = bn_relu(x @ w1 + b1, g1, be1)
    h2 = bn_relu(h1 @ w2 + b2, g2, be2)
    return h2 @ w3 + b3


if __name__ == "__main__":
    key = jax.random.PRNGKey(0)
    kx, kp = jax.random.split(key)

    batch = 8
    input_size, hidden_size, output_size = 63, 512, 50

    x = jax.random.normal(kx, (batch, input_size), jnp.float32)
    params = init_params(kp, input_size, hidden_size, output_size)

    prepped, out_features = prepare_params(params)  # one-time prep, off hot path
    prepped = jax.block_until_ready(prepped)

    out = nba_mlp_forward(x, prepped, out_features)
    out = jax.block_until_ready(out)

    ref = reference_forward(x, params)
    assert out.shape == (batch, output_size)
    # Loose tolerance: kernel uses bf16 weights/activations on the MXU
    # (f32 accumulation + f32 BatchNorm), reference is full f32.
    assert jnp.allclose(out, ref, atol=1e-1, rtol=1e-1), "mismatch vs reference"

    print("KERNEL_OK")
</pallas_src>

<mosaic_0001>
module attributes {stable_mosaic.version = 11 : i64} {
  func.func @mlp_kernel(%arg0: memref<8x63xf32, #tpu.memory_space<vmem>>, %arg1: memref<63x512xbf16, #tpu.memory_space<vmem>>, %arg2: memref<512x256xbf16, #tpu.memory_space<vmem>>, %arg3: memref<256x128xbf16, #tpu.memory_space<vmem>>, %arg4: memref<5x512xf32, #tpu.memory_space<vmem>>, %arg5: memref<8x128xf32, #tpu.memory_space<vmem>>) attributes {dimension_semantics = [], scalar_prefetch = 0 : i64, scratch_operands = 0 : i64, tpu.core_type = #tpu.core_type<tc>} {
    %c0 = arith.constant 0 : index
    %c0_0 = arith.constant 0 : index
    %0 = vector.load %arg4[%c0, %c0_0] : memref<5x512xf32, #tpu.memory_space<vmem>>, vector<1x512xf32>
    %c1 = arith.constant 1 : index
    %c0_1 = arith.constant 0 : index
    %1 = vector.load %arg4[%c1, %c0_1] : memref<5x512xf32, #tpu.memory_space<vmem>>, vector<1x512xf32>
    %c2 = arith.constant 2 : index
    %c0_2 = arith.constant 0 : index
    %2 = vector.load %arg4[%c2, %c0_2] : memref<5x512xf32, #tpu.memory_space<vmem>>, vector<1x256xf32>
    %c3 = arith.constant 3 : index
    %c0_3 = arith.constant 0 : index
    %3 = vector.load %arg4[%c3, %c0_3] : memref<5x512xf32, #tpu.memory_space<vmem>>, vector<1x256xf32>
    %c4 = arith.constant 4 : index
    %c0_4 = arith.constant 0 : index
    %4 = vector.load %arg4[%c4, %c0_4] : memref<5x512xf32, #tpu.memory_space<vmem>>, vector<1x128xf32>
    %c0_5 = arith.constant 0 : index
    %c0_6 = arith.constant 0 : index
    %5 = vector.load %arg0[%c0_5, %c0_6] : memref<8x63xf32, #tpu.memory_space<vmem>>, vector<8x63xf32>
    %6 = arith.truncf %5 : vector<8x63xf32> to vector<8x63xbf16>
    %c0_7 = arith.constant 0 : index
    %c0_8 = arith.constant 0 : index
    %7 = vector.load %arg1[%c0_7, %c0_8] : memref<63x512xbf16, #tpu.memory_space<vmem>>, vector<63x512xbf16>
    %cst = arith.constant dense<0.000000e+00> : vector<8x512xf32>
    %8 = tpu.matmul %6, %7, %cst {dimension_numbers = #tpu.dot_dimension_numbers<[1], [0], [0], [1], [0, 0, 1, 1], [], []>} : vector<8x63xbf16>, vector<63x512xbf16>, vector<8x512xf32> -> vector<8x512xf32>
    %cst_9 = arith.constant dense<0.000000e+00> : vector<512xf32>
    %9 = vector.multi_reduction <add>, %8, %cst_9 [0] : vector<8x512xf32> to vector<512xf32>
    %10 = vector.shape_cast %9 : vector<512xf32> to vector<1x512xf32>
    %cst_10 = arith.constant 8.000000e+00 : f32
    %11 = vector.broadcast %cst_10 : f32 to vector<1x512xf32>
    %12 = arith.divf %10, %11 : vector<1x512xf32>
    %13 = arith.mulf %8, %8 : vector<8x512xf32>
    %cst_11 = arith.constant dense<0.000000e+00> : vector<512xf32>
    %14 = vector.multi_reduction <add>, %13, %cst_11 [0] : vector<8x512xf32> to vector<512xf32>
    %15 = vector.shape_cast %14 : vector<512xf32> to vector<1x512xf32>
    %cst_12 = arith.constant 8.000000e+00 : f32
    %16 = vector.broadcast %cst_12 : f32 to vector<1x512xf32>
    %17 = arith.divf %15, %16 : vector<1x512xf32>
    %18 = arith.mulf %12, %12 : vector<1x512xf32>
    %19 = arith.subf %17, %18 : vector<1x512xf32>
    %cst_13 = arith.constant 0.000000e+00 : f32
    %20 = vector.broadcast %cst_13 : f32 to vector<1x512xf32>
    %21 = arith.maximumf %19, %20 : vector<1x512xf32>
    %cst_14 = arith.constant 9.99999974E-6 : f32
    %22 = vector.broadcast %cst_14 : f32 to vector<1x512xf32>
    %23 = arith.addf %21, %22 : vector<1x512xf32>
    %24 = math.rsqrt %23 : vector<1x512xf32>
    %25 = vector.broadcast %12 : vector<1x512xf32> to vector<8x512xf32>
    %26 = arith.subf %8, %25 : vector<8x512xf32>
    %27 = vector.broadcast %0 : vector<1x512xf32> to vector<8x512xf32>
    %28 = arith.mulf %27, %26 : vector<8x512xf32>
    %29 = vector.broadcast %24 : vector<1x512xf32> to vector<8x512xf32>
    %30 = arith.mulf %28, %29 : vector<8x512xf32>
    %31 = vector.broadcast %1 : vector<1x512xf32> to vector<8x512xf32>
    %32 = arith.addf %30, %31 : vector<8x512xf32>
    %cst_15 = arith.constant 0.000000e+00 : f32
    %33 = vector.broadcast %cst_15 : f32 to vector<8x512xf32>
    %34 = arith.maximumf %32, %33 : vector<8x512xf32>
    %35 = arith.truncf %34 : vector<8x512xf32> to vector<8x512xbf16>
    %c0_16 = arith.constant 0 : index
    %c0_17 = arith.constant 0 : index
    %36 = vector.load %arg2[%c0_16, %c0_17] : memref<512x256xbf16, #tpu.memory_space<vmem>>, vector<512x256xbf16>
    %cst_18 = arith.constant dense<0.000000e+00> : vector<8x256xf32>
    %37 = tpu.matmul %35, %36, %cst_18 {dimension_numbers = #tpu.dot_dimension_numbers<[1], [0], [0], [1], [0, 0, 1, 1], [], []>} : vector<8x512xbf16>, vector<512x256xbf16>, vector<8x256xf32> -> vector<8x256xf32>
    %cst_19 = arith.constant dense<0.000000e+00> : vector<256xf32>
    %38 = vector.multi_reduction <add>, %37, %cst_19 [0] : vector<8x256xf32> to vector<256xf32>
    %39 = vector.shape_cast %38 : vector<256xf32> to vector<1x256xf32>
    %cst_20 = arith.constant 8.000000e+00 : f32
    %40 = vector.broadcast %cst_20 : f32 to vector<1x256xf32>
    %41 = arith.divf %39, %40 : vector<1x256xf32>
    %42 = arith.mulf %37, %37 : vector<8x256xf32>
    %cst_21 = arith.constant dense<0.000000e+00> : vector<256xf32>
    %43 = vector.multi_reduction <add>, %42, %cst_21 [0] : vector<8x256xf32> to vector<256xf32>
    %44 = vector.shape_cast %43 : vector<256xf32> to vector<1x256xf32>
    %cst_22 = arith.constant 8.000000e+00 : f32
    %45 = vector.broadcast %cst_22 : f32 to vector<1x256xf32>
    %46 = arith.divf %44, %45 : vector<1x256xf32>
    %47 = arith.mulf %41, %41 : vector<1x256xf32>
    %48 = arith.subf %46, %47 : vector<1x256xf32>
    %cst_23 = arith.constant 0.000000e+00 : f32
    %49 = vector.broadcast %cst_23 : f32 to vector<1x256xf32>
    %50 = arith.maximumf %48, %49 : vector<1x256xf32>
    %cst_24 = arith.constant 9.99999974E-6 : f32
    %51 = vector.broadcast %cst_24 : f32 to vector<1x256xf32>
    %52 = arith.addf %50, %51 : vector<1x256xf32>
    %53 = math.rsqrt %52 : vector<1x256xf32>
    %54 = vector.broadcast %41 : vector<1x256xf32> to vector<8x256xf32>
    %55 = arith.subf %37, %54 : vector<8x256xf32>
    %56 = vector.broadcast %2 : vector<1x256xf32> to vector<8x256xf32>
    %57 = arith.mulf %56, %55 : vector<8x256xf32>
    %58 = vector.broadcast %53 : vector<1x256xf32> to vector<8x256xf32>
    %59 = arith.mulf %57, %58 : vector<8x256xf32>
    %60 = vector.broadcast %3 : vector<1x256xf32> to vector<8x256xf32>
    %61 = arith.addf %59, %60 : vector<8x256xf32>
    %cst_25 = arith.constant 0.000000e+00 : f32
    %62 = vector.broadcast %cst_25 : f32 to vector<8x256xf32>
    %63 = arith.maximumf %61, %62 : vector<8x256xf32>
    %64 = arith.truncf %63 : vector<8x256xf32> to vector<8x256xbf16>
    %c0_26 = arith.constant 0 : index
    %c0_27 = arith.constant 0 : index
    %65 = vector.load %arg3[%c0_26, %c0_27] : memref<256x128xbf16, #tpu.memory_space<vmem>>, vector<256x128xbf16>
    %cst_28 = arith.constant dense<0.000000e+00> : vector<8x128xf32>
    %66 = tpu.matmul %64, %65, %cst_28 {dimension_numbers = #tpu.dot_dimension_numbers<[1], [0], [0], [1], [0, 0, 1, 1], [], []>} : vector<8x256xbf16>, vector<256x128xbf16>, vector<8x128xf32> -> vector<8x128xf32>
    %67 = vector.broadcast %4 : vector<1x128xf32> to vector<8x128xf32>
    %68 = arith.addf %66, %67 : vector<8x128xf32>
    %c0_29 = arith.constant 0 : index
    %c0_30 = arith.constant 0 : index
    %69 = vector.load %arg5[%c0_29, %c0_30] : memref<8x128xf32, #tpu.memory_space<vmem>>, vector<8x128xf32>
    tpu.vector_store %arg5[%c0_29, %c0_30], %68 {strides = array<i32>} : memref<8x128xf32, #tpu.memory_space<vmem>>, vector<8x128xf32>,
    return
  }
}

</mosaic_0001>

<llo_original>
// kernel: nba_mlp_forward.1
$region0: #{nba_mlp_forward.1}
  #allocation0 [shape = 'u32[]', space=smem, size = 0x4, offset = 0x4, fixed_abs, tag = 'smem constant byte address 0x4 - core index']
  #allocation1 [shape = 'u32[144,128]{1,0:T(1,128)}', space=vmem, size = 0x12000, scoped, tag = 'internal scratch']
  %s0 = inlined_call_operand.hbm [shape: f32[8,63], index: 0, kind: input, shape index: {}]
  %s1 = inlined_call_operand.hbm [shape: bf16[63,512], index: 1, kind: input, shape index: {}]
  %s2 = inlined_call_operand.hbm [shape: bf16[512,256], index: 2, kind: input, shape index: {}]
  %s3 = inlined_call_operand.hbm [shape: bf16[256,128], index: 3, kind: input, shape index: {}]
  %s4 = inlined_call_operand.hbm [shape: f32[5,512], index: 4, kind: input, shape index: {}]
  %s5 = inlined_call_operand.hbm [shape: f32[8,128], index: 5, kind: output, shape index: {}]
  %s6 = sld [smem:[#allocation0]]
  $region50: #{nba_mlp_forward.1} parent=0
    _
  %s8 = ssub.s32 1, %s6
  %s9 = scalar_select 0, %s8, %s6
  $region1: #{nba_mlp_forward.1} parent=0
    #allocation2 [shape = 'u8[4096]{0}', space=vmem, size = 0x1000, scoped, tag = 'input window, operand 0, single buffered']
    #allocation3 [shape = 's32[1]{0}', space=sflag, size = 0x4, scoped, tag = 'scoped memory for nba_mlp_forward.1']
    #allocation4 [shape = 's32[1]{0}', space=sflag, size = 0x4, scoped, tag = 'scoped memory for nba_mlp_forward.1']
    #allocation5 [shape = 'u8[65536]{0}', space=vmem, size = 0x10000, scoped, tag = 'input window, operand 1, single buffered']
    #allocation6 [shape = 's32[1]{0}', space=sflag, size = 0x4, scoped, tag = 'scoped memory for nba_mlp_forward.1']
    #allocation7 [shape = 'u8[262144]{0}', space=vmem, size = 0x40000, scoped, tag = 'input window, operand 2, single buffered']
    #allocation8 [shape = 'u8[65536]{0}', space=vmem, size = 0x10000, scoped, tag = 'input window, operand 3, single buffered']
    #allocation9 [shape = 's32[1]{0}', space=sflag, size = 0x4, scoped, tag = 'scoped memory for nba_mlp_forward.1']
    #allocation10 [shape = 'u8[16384]{0}', space=vmem, size = 0x4000, scoped, tag = 'input window, operand 4, single buffered']
    #allocation11 [shape = 'u8[4096]{0}', space=vmem, size = 0x1000, scoped, tag = 'output window, operand 0, single buffered']
    %10 = vsyncpa [#allocation3], 0
    %11 = vsyncpa [#allocation6], 0
    %12 = vsyncpa [#allocation9], 0
    %13 = vsyncpa [#allocation4], 0
    // Predicated region
    $region2: #{nba_mlp_forward.1} parent=1 // pred_check
      _
    $region3: #{nba_mlp_forward.1} parent=1 // pred_check_branch
      %15 = sbr.rel (0) target = $region5
    $region4: #{nba_mlp_forward.1} parent=1 // pred_region
      %s17 = ssub.s32 128, 128
      %18 = vsyncadd [#allocation3], %s17
      %s20 = sshll.u32 [#allocation2], 4
      %s21 = int_to_ptr.vmem [resolvable:$true] %s20
      %23 = dma.hbm_to_vmem [thread:$0]  %s0, 128, %s21, [#allocation3]
    $region5: #{nba_mlp_forward.1} parent=1 // pred_fallthru
      _
    // Predicated region
    $region6: #{nba_mlp_forward.1} parent=1 // pred_check
      _
    $region7: #{nba_mlp_forward.1} parent=1 // pred_check_branch
      %25 = sbr.rel (0) target = $region9
    $region8: #{nba_mlp_forward.1} parent=1 // pred_region
      %s27 = ssub.s32 2048, 2048
      %28 = vsyncadd [#allocation6], %s27
      %s29 = sshll.u32 [#allocation5], 4
      %s30 = int_to_ptr.vmem [resolvable:$true] %s29
      %35 = dma.hbm_to_vmem [thread:$0]  %s1, 2048, %s30, [#allocation6], 256, 256, 16
    $region9: #{nba_mlp_forward.1} parent=1 // pred_fallthru
      _
    // Predicated region
    $region10: #{nba_mlp_forward.1} parent=1 // pred_check
      _
    $region11: #{nba_mlp_forward.1} parent=1 // pred_check_branch
      %37 = sbr.rel (0) target = $region13
    $region12: #{nba_mlp_forward.1} parent=1 // pred_region
      %s39 = ssub.s32 8192, 8192
      %40 = vsyncadd [#allocation6], %s39
      %s41 = sshll.u32 [#allocation7], 4
      %s42 = int_to_ptr.vmem [resolvable:$true] %s41
      %47 = dma.hbm_to_vmem [thread:$0]  %s2, 8192, %s42, [#allocation6], 128, 128, 8
    $region13: #{nba_mlp_forward.1} parent=1 // pred_fallthru
      _
    // Predicated region
    $region14: #{nba_mlp_forward.1} parent=1 // pred_check
      _
    $region15: #{nba_mlp_forward.1} parent=1 // pred_check_branch
      %49 = sbr.rel (0) target = $region17
    $region16: #{nba_mlp_forward.1} parent=1 // pred_region
      %s51 = ssub.s32 2048, 2048
      %52 = vsyncadd [#allocation9], %s51
      %s53 = sshll.u32 [#allocation8], 4
      %s54 = int_to_ptr.vmem [resolvable:$true] %s53
      %59 = dma.hbm_to_vmem [thread:$0]  %s3, 2048, %s54, [#allocation9], 64, 64, 4
    $region17: #{nba_mlp_forward.1} parent=1 // pred_fallthru
      _
    // Predicated region
    $region18: #{nba_mlp_forward.1} parent=1 // pred_check
      _
    $region19: #{nba_mlp_forward.1} parent=1 // pred_check_branch
      %61 = sbr.rel (0) target = $region21
    $region20: #{nba_mlp_forward.1} parent=1 // pred_region
      %s63 = ssub.s32 512, 512
      %64 = vsyncadd [#allocation9], %s63
      %s66 = sshll.u32 [#allocation10], 4
      %s67 = int_to_ptr.vmem [resolvable:$true] %s66
      %69 = dma.hbm_to_vmem [thread:$0]  %s4, 512, %s67, [#allocation9]
    $region21: #{nba_mlp_forward.1} parent=1 // pred_fallthru
      _
    // Predicated region
    $region22: #{nba_mlp_forward.1} parent=1 // pred_check
      _
    $region23: #{nba_mlp_forward.1} parent=1 // pred_check_branch
      %71 = sbr.rel (0) target = $region25
    $region24: #{nba_mlp_forward.1} parent=1 // pred_region
      %72 = dma.done [#allocation3], 128
    $region25: #{nba_mlp_forward.1} parent=1 // pred_fallthru
      _
    // Predicated region
    $region26: #{nba_mlp_forward.1} parent=1 // pred_check
      _
    $region27: #{nba_mlp_forward.1} parent=1 // pred_check_branch
      %74 = sbr.rel (0) target = $region29
    $region28: #{nba_mlp_forward.1} parent=1 // pred_region
      %75 = dma.done [#allocation6], 2048
    $region29: #{nba_mlp_forward.1} parent=1 // pred_fallthru
      _
    // Predicated region
    $region30: #{nba_mlp_forward.1} parent=1 // pred_check
      _
    $region31: #{nba_mlp_forward.1} parent=1 // pred_check_branch
      %77 = sbr.rel (0) target = $region33
    $region32: #{nba_mlp_forward.1} parent=1 // pred_region
      %78 = dma.done [#allocation6], 8192
    $region33: #{nba_mlp_forward.1} parent=1 // pred_fallthru
      _
    // Predicated region
    $region34: #{nba_mlp_forward.1} parent=1 // pred_check
      _
    $region35: #{nba_mlp_forward.1} parent=1 // pred_check_branch
      %80 = sbr.rel (0) target = $region37
    $region36: #{nba_mlp_forward.1} parent=1 // pred_region
      %81 = dma.done [#allocation9], 2048
    $region37: #{nba_mlp_forward.1} parent=1 // pred_fallthru
      _
    // Predicated region
    $region38: #{nba_mlp_forward.1} parent=1 // pred_check
      _
    $region39: #{nba_mlp_forward.1} parent=1 // pred_check_branch
      %83 = sbr.rel (0) target = $region41
    $region40: #{nba_mlp_forward.1} parent=1 // pred_region
      %84 = dma.done [#allocation9], 512
    $region41: #{nba_mlp_forward.1} parent=1 // pred_fallthru
      _
    %v86 = vld [vmem:[#allocation10] ss:$8 sm:$0xf]
    %s87 = scalar_lea.vmem [#allocation10], 1
    %v88 = vld [vmem:[%s87] ss:$8 sm:$0xf]
    %s89 = scalar_lea.vmem [#allocation10], 2
    %v90 = vld [vmem:[%s89] ss:$8 sm:$0x3]
    %s91 = scalar_lea.vmem [#allocation10], 3
    %v92 = vld [vmem:[%s91] ss:$8 sm:$0x3]
    %v93 = vld [vmem:[#allocation10 + $0x4] ss:$0 sm:$0xff]
    %v94 = vld [vmem:[#allocation2] sm:$0xff]
    %v95 = vpack.c.bf16 %v94, %v94
    %v96 = vld [vmem:[#allocation5] sm:$0xff]
    %v97 = vld [vmem:[#allocation5 + $0x8] sm:$0xff]
    %v98 = vld [vmem:[#allocation5 + $0x10] sm:$0xff]
    %v99 = vld [vmem:[#allocation5 + $0x18] sm:$0xff]
    %v100 = vld [vmem:[#allocation5 + $0x20] sm:$0xff]
    %v101 = vld [vmem:[#allocation5 + $0x28] sm:$0xff]
    %v102 = vld [vmem:[#allocation5 + $0x30] sm:$0xff]
    %v103 = vld [vmem:[#allocation5 + $0x38] sm:$0xff]
    %v104 = vld [vmem:[#allocation5 + $0x40] sm:$0xff]
    %v105 = vld [vmem:[#allocation5 + $0x48] sm:$0xff]
    %v106 = vld [vmem:[#allocation5 + $0x50] sm:$0xff]
    %v107 = vld [vmem:[#allocation5 + $0x58] sm:$0xff]
    %v108 = vld [vmem:[#allocation5 + $0x60] sm:$0xff]
    %v109 = vld [vmem:[#allocation5 + $0x68] sm:$0xff]
    %v110 = vld [vmem:[#allocation5 + $0x70] sm:$0xff]
    %v111 = vld [vmem:[#allocation5 + $0x78] sm:$0xff]
    %v128 = vunpack.c.l.b16 %v96
    %v129 = vunpack.c.h.b16 %v96
    %v130 = vunpack.c.l.b16 %v97
    %v131 = vunpack.c.h.b16 %v97
    %v132 = vunpack.c.l.b16 %v98
    %v133 = vunpack.c.h.b16 %v98
    %v134 = vunpack.c.l.b16 %v99
    %v135 = vunpack.c.h.b16 %v99
    %v136 = vunpack.c.l.b16 %v100
    %v137 = vunpack.c.h.b16 %v100
    %v138 = vunpack.c.l.b16 %v101
    %v139 = vunpack.c.h.b16 %v101
    %v140 = vunpack.c.l.b16 %v102
    %v141 = vunpack.c.h.b16 %v102
    %v142 = vunpack.c.l.b16 %v103
    %v143 = vunpack.c.h.b16 %v103
    %v144 = vunpack.c.l.b16 %v104
    %v145 = vunpack.c.h.b16 %v104
    %v146 = vunpack.c.l.b16 %v105
    %v147 = vunpack.c.h.b16 %v105
    %v148 = vunpack.c.l.b16 %v106
    %v149 = vunpack.c.h.b16 %v106
    %v150 = vunpack.c.l.b16 %v107
    %v151 = vunpack.c.h.b16 %v107
    %v152 = vunpack.c.l.b16 %v108
    %v153 = vunpack.c.h.b16 %v108
    %v154 = vunpack.c.l.b16 %v109
    %v155 = vunpack.c.h.b16 %v109
    %v156 = vunpack.c.l.b16 %v110
    %v157 = vunpack.c.h.b16 %v110
    %v158 = vunpack.c.l.b16 %v111
    %v159 = vunpack.c.h.b16 %v111
    %v160 = vpack.c.b16 %v132, %v128
    %v161 = vpack.c.b16 %v133, %v129
    %v162 = vpack.c.b16 %v134, %v130
    %v163 = vpack.c.b16 %v135, %v131
    %v164 = vpack.c.b16 %v140, %v136
    %v165 = vpack.c.b16 %v141, %v137
    %v166 = vpack.c.b16 %v142, %v138
    %v167 = vpack.c.b16 %v143, %v139
    %v168 = vpack.c.b16 %v148, %v144
    %v169 = vpack.c.b16 %v149, %v145
    %v170 = vpack.c.b16 %v150, %v146
    %v171 = vpack.c.b16 %v151, %v147
    %v172 = vpack.c.b16 %v156, %v152
    %v173 = vpack.c.b16 %v157, %v153
    %v174 = vpack.c.b16 %v158, %v154
    %v175 = vpack.c.b16 %v159, %v155
    %vm188 = vcmask 515072
    %v190 = vsel %vm188, %v95, 0
    %vm192 = vcmask 1046528
    %vm193 = vcmask 1047552
    %v194 = vsel %vm192, 4294967295, 65535
    %v195 = vsel %vm193, %v194, 0
    %v197 = vand.u32 %v172, %v195
    %v200 = vand.u32 %v173, %v195
    %v203 = vand.u32 %v174, %v195
    %v206 = vand.u32 %v175, %v195
    %208 = vmatprep.subr.bf16.mxu0 %v161
    %209 = vmatpush1.bf16.msra.mxu0 %v160
    %210 = vmatprep.subr.bf16.mxu0 %v165
    %211 = vmatpush1.bf16.msra.mxu0 %v164
    %212 = vmatprep.subr.bf16.mxu0 %v169
    %213 = vmatpush1.bf16.msra.mxu0 %v168
    %214 = vmatprep.subr.bf16.mxu0 %v200
    %215 = vmatpush1.bf16.msra.mxu0 %v197
    %216 = vmatprep.subr.bf16.mxu0 0
    %217 = vmatpush1.bf16.msra.mxu0 0
    %218 = vmatprep.subr.bf16.mxu0 0
    %219 = vmatpush1.bf16.msra.mxu0 0
    %220 = vmatprep.subr.bf16.mxu0 0
    %221 = vmatpush1.bf16.msra.mxu0 0
    %222 = vmatprep.subr.bf16.mxu0 0
    %223 = vmatpush1.bf16.msra.mxu0 0
    %224 = vmatprep.subr.bf16.mxu0 0
    %225 = vmatpush1.bf16.msra.mxu0 0
    %226 = vmatprep.subr.bf16.mxu0 0
    %227 = vmatpush1.bf16.msra.mxu0 0
    %228 = vmatprep.subr.bf16.mxu0 0
    %229 = vmatpush1.bf16.msra.mxu0 0
    %230 = vmatprep.subr.bf16.mxu0 0
    %231 = vmatpush1.bf16.msra.mxu0 0
    %232 = vmatprep.subr.bf16.mxu0 0
    %233 = vmatpush1.bf16.msra.mxu0 0
    %234 = vmatprep.subr.bf16.mxu0 0
    %235 = vmatpush1.bf16.msra.mxu0 0
    %236 = vmatprep.subr.bf16.mxu0 0
    %237 = vmatpush1.bf16.msra.mxu0 0
    %238 = vmatprep.subr.bf16.mxu0 0
    %239 = vmatpush1.bf16.msra.mxu0 0
    %240 = vmatprep.mubr.bf16.mxu0 0
    %241 = vmatmul.mubr.bf16.gmra.mrb[0].mxu0 %v190
    %v242 = vpop.f32.mrb[0].mxu0
    %v243 = vadd.f32 0.0, %v242
    %v244 = vpop.f32.mrb[0].mxu0
    %v245 = vadd.f32 0.0, %v244
    %v246 = vpop.f32.mrb[0].mxu0
    %v247 = vpop.f32.mrb[0].mxu0
    %248 = vdwg.mxu0
    %249 = vmatprep.subr.bf16.mxu0 %v163
    %250 = vmatpush1.bf16.msra.mxu0 %v162
    %251 = vmatprep.subr.bf16.mxu0 %v167
    %252 = vmatpush1.bf16.msra.mxu0 %v166
    %253 = vmatprep.subr.bf16.mxu0 %v171
    %254 = vmatpush1.bf16.msra.mxu0 %v170
    %255 = vmatprep.subr.bf16.mxu0 %v206
    %256 = vmatpush1.bf16.msra.mxu0 %v203
    %257 = vmatprep.subr.bf16.mxu0 0
    %258 = vmatpush1.bf16.msra.mxu0 0
    %259 = vmatprep.subr.bf16.mxu0 0
    %260 = vmatpush1.bf16.msra.mxu0 0
    %261 = vmatprep.subr.bf16.mxu0 0
    %262 = vmatpush1.bf16.msra.mxu0 0
    %263 = vmatprep.subr.bf16.mxu0 0
    %264 = vmatpush1.bf16.msra.mxu0 0
    %265 = vmatprep.subr.bf16.mxu0 0
    %266 = vmatpush1.bf16.msra.mxu0 0
    %267 = vmatprep.subr.bf16.mxu0 0
    %268 = vmatpush1.bf16.msra.mxu0 0
    %269 = vmatprep.subr.bf16.mxu0 0
    %270 = vmatpush1.bf16.msra.mxu0 0
    %271 = vmatprep.subr.bf16.mxu0 0
    %272 = vmatpush1.bf16.msra.mxu0 0
    %273 = vmatprep.subr.bf16.mxu0 0
    %274 = vmatpush1.bf16.msra.mxu0 0
    %275 = vmatprep.subr.bf16.mxu0 0
    %276 = vmatpush1.bf16.msra.mxu0 0
    %277 = vmatprep.subr.bf16.mxu0 0
    %278 = vmatpush1.bf16.msra.mxu0 0
    %279 = vmatprep.subr.bf16.mxu0 0
    %280 = vmatpush1.bf16.msra.mxu0 0
    %281 = vmatprep.mubr.bf16.mxu0 0
    %282 = vmatmul.mubr.bf16.gmra.mrb[0].mxu0 %v190
    %v283 = vpop.f32.mrb[0].mxu0
    %v284 = vadd.f32 0.0, %v283
    %v285 = vpop.f32.mrb[0].mxu0
    %v286 = vadd.f32 0.0, %v285
    %v287 = vpop.f32.mrb[0].mxu0
    %v288 = vpop.f32.mrb[0].mxu0
    %289 = vdwg.mxu0
    %v290 = vrot.slane %v243, 4
    %v291 = vadd.f32 %v243, %v290
    %v292 = vrot.slane %v291, 2
    %v293 = vadd.f32 %v291, %v292
    %v294 = vrot.slane %v293, 1
    %v295 = vadd.f32 %v293, %v294
    %v296 = vrot.slane %v245, 4
    %v297 = vadd.f32 %v245, %v296
    %v298 = vrot.slane %v297, 2
    %v299 = vadd.f32 %v297, %v298
    %v300 = vrot.slane %v299, 1
    %v301 = vadd.f32 %v299, %v300
    %v302 = vrot.slane %v284, 4
    %v303 = vadd.f32 %v284, %v302
    %v304 = vrot.slane %v303, 2
    %v305 = vadd.f32 %v303, %v304
    %v306 = vrot.slane %v305, 1
    %v307 = vadd.f32 %v305, %v306
    %v308 = vrot.slane %v286, 4
    %v309 = vadd.f32 %v286, %v308
    %v310 = vrot.slane %v309, 2
    %v311 = vadd.f32 %v309, %v310
    %v312 = vrot.slane %v311, 1
    %v313 = vadd.f32 %v311, %v312
    %v314 = vrcp.pop 8.0
    %v315 = vmul.f32 %v295, %v314
    %v316 = vmul.f32 %v301, %v314
    %v317 = vmul.f32 %v307, %v314
    %v318 = vmul.f32 %v313, %v314
    %v319 = vmul.f32 %v243, %v243
    %v320 = vmul.f32 %v245, %v245
    %v321 = vmul.f32 %v284, %v284
    %v322 = vmul.f32 %v286, %v286
    %v323 = vrot.slane %v319, 4
    %v324 = vadd.f32 %v319, %v323
    %v325 = vrot.slane %v324, 2
    %v326 = vadd.f32 %v324, %v325
    %v327 = vrot.slane %v326, 1
    %v328 = vadd.f32 %v326, %v327
    %v329 = vrot.slane %v320, 4
    %v330 = vadd.f32 %v320, %v329
    %v331 = vrot.slane %v330, 2
    %v332 = vadd.f32 %v330, %v331
    %v333 = vrot.slane %v332, 1
    %v334 = vadd.f32 %v332, %v333
    %v335 = vrot.slane %v321, 4
    %v336 = vadd.f32 %v321, %v335
    %v337 = vrot.slane %v336, 2
    %v338 = vadd.f32 %v336, %v337
    %v339 = vrot.slane %v338, 1
    %v340 = vadd.f32 %v338, %v339
    %v341 = vrot.slane %v322, 4
    %v342 = vadd.f32 %v322, %v341
    %v343 = vrot.slane %v342, 2
    %v344 = vadd.f32 %v342, %v343
    %v345 = vrot.slane %v344, 1
    %v346 = vadd.f32 %v344, %v345
    %v347 = vmul.f32 %v328, %v314
    %v348 = vmul.f32 %v334, %v314
    %v349 = vmul.f32 %v340, %v314
    %v350 = vmul.f32 %v346, %v314
    %v351 = vmul.f32 %v315, %v315
    %v352 = vmul.f32 %v316, %v316
    %v353 = vmul.f32 %v317, %v317
    %v354 = vmul.f32 %v318, %v318
    %v355 = vsub.f32 %v347, %v351
    %v356 = vsub.f32 %v348, %v352
    %v357 = vsub.f32 %v349, %v353
    %v358 = vsub.f32 %v350, %v354
    %v359 = vmax.f32 %v355, 0.0
    %v360 = vmax.f32 %v356, 0.0
    %v361 = vmax.f32 %v357, 0.0
    %v362 = vmax.f32 %v358, 0.0
    %v363 = vadd.f32 %v359, 1e-05
    %v364 = vadd.f32 %v360, 1e-05
    %v365 = vadd.f32 %v361, 1e-05
    %v366 = vadd.f32 %v362, 1e-05
    %v367 = vrsqrt.pop %v363
    %v368 = vrsqrt.pop %v364
    %v369 = vrsqrt.pop %v365
    %v370 = vrsqrt.pop %v366
    %v371 = vsub.f32 %v243, %v315
    %v372 = vsub.f32 %v245, %v316
    %v373 = vsub.f32 %v284, %v317
    %v374 = vsub.f32 %v286, %v318
    %v376 = vlaneseq
    %v377 = vshrl.u32 %v376, 7
    %v378 = vsub.s32 0, %v377
    %v379 = vrot.slane %v86, %v378
    %v380 = vlaneseq
    %v381 = vshrl.u32 %v380, 7
    %v382 = vsub.s32 1, %v381
    %v383 = vrot.slane %v86, %v382
    %v384 = vlaneseq
    %v385 = vshrl.u32 %v384, 7
    %v386 = vsub.s32 2, %v385
    %v387 = vrot.slane %v86, %v386
    %v388 = vlaneseq
    %v389 = vshrl.u32 %v388, 7
    %v390 = vsub.s32 3, %v389
    %v391 = vrot.slane %v86, %v390
    %v396 = vmul.f32 %v379, %v371
    %v397 = vmul.f32 %v383, %v372
    %v398 = vmul.f32 %v387, %v373
    %v399 = vmul.f32 %v391, %v374
    %v400 = vmul.f32 %v396, %v367
    %v401 = vmul.f32 %v397, %v368
    %v402 = vmul.f32 %v398, %v369
    %v403 = vmul.f32 %v399, %v370
    %v405 = vlaneseq
    %v406 = vshrl.u32 %v405, 7
    %v407 = vsub.s32 0, %v406
    %v408 = vrot.slane %v88, %v407
    %v409 = vlaneseq
    %v410 = vshrl.u32 %v409, 7
    %v411 = vsub.s32 1, %v410
    %v412 = vrot.slane %v88, %v411
    %v413 = vlaneseq
    %v414 = vshrl.u32 %v413, 7
    %v415 = vsub.s32 2, %v414
    %v416 = vrot.slane %v88, %v415
    %v417 = vlaneseq
    %v418 = vshrl.u32 %v417, 7
    %v419 = vsub.s32 3, %v418
    %v420 = vrot.slane %v88, %v419
    %v425 = vadd.f32 %v400, %v408
    %v426 = vadd.f32 %v401, %v412
    %v427 = vadd.f32 %v402, %v416
    %v428 = vadd.f32 %v403, %v420
    %v429 = vmax.f32 %v425, 0.0
    %v430 = vmax.f32 %v426, 0.0
    %v431 = vmax.f32 %v427, 0.0
    %v432 = vmax.f32 %v428, 0.0
    %v433 = vpack.c.bf16 %v429, %v429
    %v434 = vpack.c.bf16 %v430, %v430
    %v435 = vpack.c.bf16 %v431, %v431
    %v436 = vpack.c.bf16 %v432, %v432
    %v437 = vld [vmem:[#allocation7] sm:$0xff]
    %v438 = vld [vmem:[#allocation7 + $0x8] sm:$0xff]
    %v439 = vld [vmem:[#allocation7 + $0x10] sm:$0xff]
    %v440 = vld [vmem:[#allocation7 + $0x18] sm:$0xff]
    %v441 = vld [vmem:[#allocation7 + $0x20] sm:$0xff]
    %v442 = vld [vmem:[#allocation7 + $0x28] sm:$0xff]
    %v443 = vld [vmem:[#allocation7 + $0x30] sm:$0xff]
    %v444 = vld [vmem:[#allocation7 + $0x38] sm:$0xff]
    %v445 = vld [vmem:[#allocation7 + $0x40] sm:$0xff]
    %v446 = vld [vmem:[#allocation7 + $0x48] sm:$0xff]
    %v447 = vld [vmem:[#allocation7 + $0x50] sm:$0xff]
    %v448 = vld [vmem:[#allocation7 + $0x58] sm:$0xff]
    %v449 = vld [vmem:[#allocation7 + $0x60] sm:$0xff]
    %v450 = vld [vmem:[#allocation7 + $0x68] sm:$0xff]
    %v451 = vld [vmem:[#allocation7 + $0x70] sm:$0xff]
    %v452 = vld [vmem:[#allocation7 + $0x78] sm:$0xff]
    %v453 = vld [vmem:[#allocation7 + $0x80] sm:$0xff]
    %v454 = vld [vmem:[#allocation7 + $0x88] sm:$0xff]
    %v455 = vld [vmem:[#allocation7 + $0x90] sm:$0xff]
    %v456 = vld [vmem:[#allocation7 + $0x98] sm:$0xff]
    %v457 = vld [vmem:[#allocation7 + $0xa0] sm:$0xff]
    %v458 = vld [vmem:[#allocation7 + $0xa8] sm:$0xff]
    %v459 = vld [vmem:[#allocation7 + $0xb0] sm:$0xff]
    %v460 = vld [vmem:[#allocation7 + $0xb8] sm:$0xff]
    %v461 = vld [vmem:[#allocation7 + $0xc0] sm:$0xff]
    %v462 = vld [vmem:[#allocation7 + $0xc8] sm:$0xff]
    %v463 = vld [vmem:[#allocation7 + $0xd0] sm:$0xff]
    %v464 = vld [vmem:[#allocation7 + $0xd8] sm:$0xff]
    %v465 = vld [vmem:[#allocation7 + $0xe0] sm:$0xff]
    %v466 = vld [vmem:[#allocation7 + $0xe8] sm:$0xff]
    %v467 = vld [vmem:[#allocation7 + $0xf0] sm:$0xff]
    %v468 = vld [vmem:[#allocation7 + $0xf8] sm:$0xff]
    %v469 = vld [vmem:[#allocation7 + $0x100] sm:$0xff]
    %v470 = vld [vmem:[#allocation7 + $0x108] sm:$0xff]
    %v471 = vld [vmem:[#allocation7 + $0x110] sm:$0xff]
    %v472 = vld [vmem:[#allocation7 + $0x118] sm:$0xff]
    %v473 = vld [vmem:[#allocation7 + $0x120] sm:$0xff]
    %v474 = vld [vmem:[#allocation7 + $0x128] sm:$0xff]
    %v475 = vld [vmem:[#allocation7 + $0x130] sm:$0xff]
    %v476 = vld [vmem:[#allocation7 + $0x138] sm:$0xff]
    %v477 = vld [vmem:[#allocation7 + $0x140] sm:$0xff]
    %v478 = vld [vmem:[#allocation7 + $0x148] sm:$0xff]
    %v479 = vld [vmem:[#allocation7 + $0x150] sm:$0xff]
    %v480 = vld [vmem:[#allocation7 + $0x158] sm:$0xff]
    %v481 = vld [vmem:[#allocation7 + $0x160] sm:$0xff]
    %v482 = vld [vmem:[#allocation7 + $0x168] sm:$0xff]
    %v483 = vld [vmem:[#allocation7 + $0x170] sm:$0xff]
    %v484 = vld [vmem:[#allocation7 + $0x178] sm:$0xff]
    %v485 = vld [vmem:[#allocation7 + $0x180] sm:$0xff]
    %v486 = vld [vmem:[#allocation7 + $0x188] sm:$0xff]
    %v487 = vld [vmem:[#allocation7 + $0x190] sm:$0xff]
    %v488 = vld [vmem:[#allocation7 + $0x198] sm:$0xff]
    %v489 = vld [vmem:[#allocation7 + $0x1a0] sm:$0xff]
    %v490 = vld [vmem:[#allocation7 + $0x1a8] sm:$0xff]
    %v491 = vld [vmem:[#allocation7 + $0x1b0] sm:$0xff]
    %v492 = vld [vmem:[#allocation7 + $0x1b8] sm:$0xff]
    %v493 = vld [vmem:[#allocation7 + $0x1c0] sm:$0xff]
    %v494 = vld [vmem:[#allocation7 + $0x1c8] sm:$0xff]
    %v495 = vld [vmem:[#allocation7 + $0x1d0] sm:$0xff]
    %v496 = vld [vmem:[#allocation7 + $0x1d8] sm:$0xff]
    %v497 = vld [vmem:[#allocation7 + $0x1e0] sm:$0xff]
    %v498 = vld [vmem:[#allocation7 + $0x1e8] sm:$0xff]
    %v499 = vld [vmem:[#allocation7 + $0x1f0] sm:$0xff]
    %v500 = vld [vmem:[#allocation7 + $0x1f8] sm:$0xff]
    %v565 = vunpack.c.l.b16 %v437
    %v566 = vunpack.c.h.b16 %v437
    %v567 = vunpack.c.l.b16 %v438
    %v568 = vunpack.c.h.b16 %v438
    %v569 = vunpack.c.l.b16 %v439
    %v570 = vunpack.c.h.b16 %v439
    %v571 = vunpack.c.l.b16 %v440
    %v572 = vunpack.c.h.b16 %v440
    %v573 = vunpack.c.l.b16 %v441
    %v574 = vunpack.c.h.b16 %v441
    %v575 = vunpack.c.l.b16 %v442
    %v576 = vunpack.c.h.b16 %v442
    %v577 = vunpack.c.l.b16 %v443
    %v578 = vunpack.c.h.b16 %v443
    %v579 = vunpack.c.l.b16 %v444
    %v580 = vunpack.c.h.b16 %v444
    %v581 = vunpack.c.l.b16 %v445
    %v582 = vunpack.c.h.b16 %v445
    %v583 = vunpack.c.l.b16 %v446
    %v584 = vunpack.c.h.b16 %v446
    %v585 = vunpack.c.l.b16 %v447
    %v586 = vunpack.c.h.b16 %v447
    %v587 = vunpack.c.l.b16 %v448
    %v588 = vunpack.c.h.b16 %v448
    %v589 = vunpack.c.l.b16 %v449
    %v590 = vunpack.c.h.b16 %v449
    %v591 = vunpack.c.l.b16 %v450
    %v592 = vunpack.c.h.b16 %v450
    %v593 = vunpack.c.l.b16 %v451
    %v594 = vunpack.c.h.b16 %v451
    %v595 = vunpack.c.l.b16 %v452
    %v596 = vunpack.c.h.b16 %v452
    %v597 = vunpack.c.l.b16 %v453
    %v598 = vunpack.c.h.b16 %v453
    %v599 = vunpack.c.l.b16 %v454
    %v600 = vunpack.c.h.b16 %v454
    %v601 = vunpack.c.l.b16 %v455
    %v602 = vunpack.c.h.b16 %v455
    %v603 = vunpack.c.l.b16 %v456
    %v604 = vunpack.c.h.b16 %v456
    %v605 = vunpack.c.l.b16 %v457
    %v606 = vunpack.c.h.b16 %v457
    %v607 = vunpack.c.l.b16 %v458
    %v608 = vunpack.c.h.b16 %v458
    %v609 = vunpack.c.l.b16 %v459
    %v610 = vunpack.c.h.b16 %v459
    %v611 = vunpack.c.l.b16 %v460
    %v612 = vunpack.c.h.b16 %v460
    %v613 = vunpack.c.l.b16 %v461
    %v614 = vunpack.c.h.b16 %v461
    %v615 = vunpack.c.l.b16 %v462
    %v616 = vunpack.c.h.b16 %v462
    %v617 = vunpack.c.l.b16 %v463
    %v618 = vunpack.c.h.b16 %v463
    %v619 = vunpack.c.l.b16 %v464
    %v620 = vunpack.c.h.b16 %v464
    %v621 = vunpack.c.l.b16 %v465
    %v622 = vunpack.c.h.b16 %v465
    %v623 = vunpack.c.l.b16 %v466
    %v624 = vunpack.c.h.b16 %v466
    %v625 = vunpack.c.l.b16 %v467
    %v626 = vunpack.c.h.b16 %v467
    %v627 = vunpack.c.l.b16 %v468
    %v628 = vunpack.c.h.b16 %v468
    %v629 = vunpack.c.l.b16 %v469
    %v630 = vunpack.c.h.b16 %v469
    %v631 = vunpack.c.l.b16 %v470
    %v632 = vunpack.c.h.b16 %v470
    %v633 = vunpack.c.l.b16 %v471
    %v634 = vunpack.c.h.b16 %v471
    %v635 = vunpack.c.l.b16 %v472
    %v636 = vunpack.c.h.b16 %v472
    %v637 = vunpack.c.l.b16 %v473
    %v638 = vunpack.c.h.b16 %v473
    %v639 = vunpack.c.l.b16 %v474
    %v640 = vunpack.c.h.b16 %v474
    %v641 = vunpack.c.l.b16 %v475
    %v642 = vunpack.c.h.b16 %v475
    %v643 = vunpack.c.l.b16 %v476
    %v644 = vunpack.c.h.b16 %v476
    %v645 = vunpack.c.l.b16 %v477
    %v646 = vunpack.c.h.b16 %v477
    %v647 = vunpack.c.l.b16 %v478
    %v648 = vunpack.c.h.b16 %v478
    %v649 = vunpack.c.l.b16 %v479
    %v650 = vunpack.c.h.b16 %v479
    %v651 = vunpack.c.l.b16 %v480
    %v652 = vunpack.c.h.b16 %v480
    %v653 = vunpack.c.l.b16 %v481
    %v654 = vunpack.c.h.b16 %v481
    %v655 = vunpack.c.l.b16 %v482
    %v656 = vunpack.c.h.b16 %v482
    %v657 = vunpack.c.l.b16 %v483
    %v658 = vunpack.c.h.b16 %v483
    %v659 = vunpack.c.l.b16 %v484
    %v660 = vunpack.c.h.b16 %v484
    %v661 = vunpack.c.l.b16 %v485
    %v662 = vunpack.c.h.b16 %v485
    %v663 = vunpack.c.l.b16 %v486
    %v664 = vunpack.c.h.b16 %v486
    %v665 = vunpack.c.l.b16 %v487
    %v666 = vunpack.c.h.b16 %v487
    %v667 = vunpack.c.l.b16 %v488
    %v668 = vunpack.c.h.b16 %v488
    %v669 = vunpack.c.l.b16 %v489
    %v670 = vunpack.c.h.b16 %v489
    %v671 = vunpack.c.l.b16 %v490
    %v672 = vunpack.c.h.b16 %v490
    %v673 = vunpack.c.l.b16 %v491
    %v674 = vunpack.c.h.b16 %v491
    %v675 = vunpack.c.l.b16 %v492
    %v676 = vunpack.c.h.b16 %v492
    %v677 = vunpack.c.l.b16 %v493
    %v678 = vunpack.c.h.b16 %v493
    %v679 = vunpack.c.l.b16 %v494
    %v680 = vunpack.c.h.b16 %v494
    %v681 = vunpack.c.l.b16 %v495
    %v682 = vunpack.c.h.b16 %v495
    %v683 = vunpack.c.l.b16 %v496
    %v684 = vunpack.c.h.b16 %v496
    %v685 = vunpack.c.l.b16 %v497
    %v686 = vunpack.c.h.b16 %v497
    %v687 = vunpack.c.l.b16 %v498
    %v688 = vunpack.c.h.b16 %v498
    %v689 = vunpack.c.l.b16 %v499
    %v690 = vunpack.c.h.b16 %v499
    %v691 = vunpack.c.l.b16 %v500
    %v692 = vunpack.c.h.b16 %v500
    %v693 = vpack.c.b16 %v567, %v565
    %v694 = vpack.c.b16 %v568, %v566
    %v695 = vpack.c.b16 %v571, %v569
    %v696 = vpack.c.b16 %v572, %v570
    %v697 = vpack.c.b16 %v575, %v573
    %v698 = vpack.c.b16 %v576, %v574
    %v699 = vpack.c.b16 %v579, %v577
    %v700 = vpack.c.b16 %v580, %v578
    %v701 = vpack.c.b16 %v583, %v581
    %v702 = vpack.c.b16 %v584, %v582
    %v703 = vpack.c.b16 %v587, %v585
    %v704 = vpack.c.b16 %v588, %v586
    %v705 = vpack.c.b16 %v591, %v589
    %v706 = vpack.c.b16 %v592, %v590
    %v707 = vpack.c.b16 %v595, %v593
    %v708 = vpack.c.b16 %v596, %v594
    %v709 = vpack.c.b16 %v599, %v597
    %v710 = vpack.c.b16 %v600, %v598
    %v711 = vpack.c.b16 %v603, %v601
    %v712 = vpack.c.b16 %v604, %v602
    %v713 = vpack.c.b16 %v607, %v605
    %v714 = vpack.c.b16 %v608, %v606
    %v715 = vpack.c.b16 %v611, %v609
    %v716 = vpack.c.b16 %v612, %v610
    %v717 = vpack.c.b16 %v615, %v613
    %v718 = vpack.c.b16 %v616, %v614
    %v719 = vpack.c.b16 %v619, %v617
    %v720 = vpack.c.b16 %v620, %v618
    %v721 = vpack.c.b16 %v623, %v621
    %v722 = vpack.c.b16 %v624, %v622
    %v723 = vpack.c.b16 %v627, %v625
    %v724 = vpack.c.b16 %v628, %v626
    %v725 = vpack.c.b16 %v631, %v629
    %v726 = vpack.c.b16 %v632, %v630
    %v727 = vpack.c.b16 %v635, %v633
    %v728 = vpack.c.b16 %v636, %v634
    %v729 = vpack.c.b16 %v639, %v637
    %v730 = vpack.c.b16 %v640, %v638
    %v731 = vpack.c.b16 %v643, %v641
    %v732 = vpack.c.b16 %v644, %v642
    %v733 = vpack.c.b16 %v647, %v645
    %v734 = vpack.c.b16 %v648, %v646
    %v735 = vpack.c.b16 %v651, %v649
    %v736 = vpack.c.b16 %v652, %v650
    %v737 = vpack.c.b16 %v655, %v653
    %v738 = vpack.c.b16 %v656, %v654
    %v739 = vpack.c.b16 %v659, %v657
    %v740 = vpack.c.b16 %v660, %v658
    %v741 = vpack.c.b16 %v663, %v661
    %v742 = vpack.c.b16 %v664, %v662
    %v743 = vpack.c.b16 %v667, %v665
    %v744 = vpack.c.b16 %v668, %v666
    %v745 = vpack.c.b16 %v671, %v669
    %v746 = vpack.c.b16 %v672, %v670
    %v747 = vpack.c.b16 %v675, %v673
    %v748 = vpack.c.b16 %v676, %v674
    %v749 = vpack.c.b16 %v679, %v677
    %v750 = vpack.c.b16 %v680, %v678
    %v751 = vpack.c.b16 %v683, %v681
    %v752 = vpack.c.b16 %v684, %v682
    %v753 = vpack.c.b16 %v687, %v685
    %v754 = vpack.c.b16 %v688, %v686
    %v755 = vpack.c.b16 %v691, %v689
    %v756 = vpack.c.b16 %v692, %v690
    %821 = vmatprep.subr.bf16.mxu0 %v694
    %822 = vmatpush1.bf16.msra.mxu0 %v693
    %823 = vmatprep.subr.bf16.mxu0 %v696
    %824 = vmatpush1.bf16.msra.mxu0 %v695
    %825 = vmatprep.subr.bf16.mxu0 %v698
    %826 = vmatpush1.bf16.msra.mxu0 %v697
    %827 = vmatprep.subr.bf16.mxu0 %v700
    %828 = vmatpush1.bf16.msra.mxu0 %v699
    %829 = vmatprep.subr.bf16.mxu0 %v702
    %830 = vmatpush1.bf16.msra.mxu0 %v701
    %831 = vmatprep.subr.bf16.mxu0 %v704
    %832 = vmatpush1.bf16.msra.mxu0 %v703
    %833 = vmatprep.subr.bf16.mxu0 %v706
    %834 = vmatpush1.bf16.msra.mxu0 %v705
    %835 = vmatprep.subr.bf16.mxu0 %v708
    %836 = vmatpush1.bf16.msra.mxu0 %v707
    %837 = vmatprep.subr.bf16.mxu0 %v710
    %838 = vmatpush1.bf16.msra.mxu0 %v709
    %839 = vmatprep.subr.bf16.mxu0 %v712
    %840 = vmatpush1.bf16.msra.mxu0 %v711
    %841 = vmatprep.subr.bf16.mxu0 %v714
    %842 = vmatpush1.bf16.msra.mxu0 %v713
    %843 = vmatprep.subr.bf16.mxu0 %v716
    %844 = vmatpush1.bf16.msra.mxu0 %v715
    %845 = vmatprep.subr.bf16.mxu0 %v718
    %846 = vmatpush1.bf16.msra.mxu0 %v717
    %847 = vmatprep.subr.bf16.mxu0 %v720
    %848 = vmatpush1.bf16.msra.mxu0 %v719
    %849 = vmatprep.subr.bf16.mxu0 %v722
    %850 = vmatpush1.bf16.msra.mxu0 %v721
    %851 = vmatprep.subr.bf16.mxu0 %v724
    %852 = vmatpush1.bf16.msra.mxu0 %v723
    %853 = vmatprep.mubr.bf16.mxu0 %v434
    %854 = vmatmul.mubr.bf16.gmra.mrb[0].mxu0 %v433
    %v855 = vpop.f32.mrb[0].mxu0
    %v856 = vadd.f32 0.0, %v855
    %v857 = vpop.f32.mrb[0].mxu0
    %v858 = vadd.f32 0.0, %v857
    %v859 = vpop.f32.mrb[0].mxu0
    %v860 = vpop.f32.mrb[0].mxu0
    %861 = vdwg.mxu0
    %862 = vmatprep.subr.bf16.mxu0 %v726
    %863 = vmatpush1.bf16.msra.mxu0 %v725
    %864 = vmatprep.subr.bf16.mxu0 %v728
    %865 = vmatpush1.bf16.msra.mxu0 %v727
    %866 = vmatprep.subr.bf16.mxu0 %v730
    %867 = vmatpush1.bf16.msra.mxu0 %v729
    %868 = vmatprep.subr.bf16.mxu0 %v732
    %869 = vmatpush1.bf16.msra.mxu0 %v731
    %870 = vmatprep.subr.bf16.mxu0 %v734
    %871 = vmatpush1.bf16.msra.mxu0 %v733
    %872 = vmatprep.subr.bf16.mxu0 %v736
    %873 = vmatpush1.bf16.msra.mxu0 %v735
    %874 = vmatprep.subr.bf16.mxu0 %v738
    %875 = vmatpush1.bf16.msra.mxu0 %v737
    %876 = vmatprep.subr.bf16.mxu0 %v740
    %877 = vmatpush1.bf16.msra.mxu0 %v739
    %878 = vmatprep.subr.bf16.mxu0 %v742
    %879 = vmatpush1.bf16.msra.mxu0 %v741
    %880 = vmatprep.subr.bf16.mxu0 %v744
    %881 = vmatpush1.bf16.msra.mxu0 %v743
    %882 = vmatprep.subr.bf16.mxu0 %v746
    %883 = vmatpush1.bf16.msra.mxu0 %v745
    %884 = vmatprep.subr.bf16.mxu0 %v748
    %885 = vmatpush1.bf16.msra.mxu0 %v747
    %886 = vmatprep.subr.bf16.mxu0 %v750
    %887 = vmatpush1.bf16.msra.mxu0 %v749
    %888 = vmatprep.subr.bf16.mxu0 %v752
    %889 = vmatpush1.bf16.msra.mxu0 %v751
    %890 = vmatprep.subr.bf16.mxu0 %v754
    %891 = vmatpush1.bf16.msra.mxu0 %v753
    %892 = vmatprep.subr.bf16.mxu0 %v756
    %893 = vmatpush1.bf16.msra.mxu0 %v755
    %894 = vmatprep.mubr.bf16.mxu0 %v436
    %895 = vmatmul.mubr.bf16.gmra.mrb[0].mxu0 %v435
    %v896 = vpop.f32.mrb[0].mxu0
    %v897 = vadd.f32 %v856, %v896
    %v898 = vpop.f32.mrb[0].mxu0
    %v899 = vadd.f32 %v858, %v898
    %v900 = vpop.f32.mrb[0].mxu0
    %v901 = vpop.f32.mrb[0].mxu0
    %902 = vdwg.mxu0
    %v903 = vrot.slane %v897, 4
    %v904 = vadd.f32 %v897, %v903
    %v905 = vrot.slane %v904, 2
    %v906 = vadd.f32 %v904, %v905
    %v907 = vrot.slane %v906, 1
    %v908 = vadd.f32 %v906, %v907
    %v909 = vrot.slane %v899, 4
    %v910 = vadd.f32 %v899, %v909
    %v911 = vrot.slane %v910, 2
    %v912 = vadd.f32 %v910, %v911
    %v913 = vrot.slane %v912, 1
    %v914 = vadd.f32 %v912, %v913
    %v915 = vmul.f32 %v908, %v314
    %v916 = vmul.f32 %v914, %v314
    %v917 = vmul.f32 %v897, %v897
    %v918 = vmul.f32 %v899, %v899
    %v919 = vrot.slane %v917, 4
    %v920 = vadd.f32 %v917, %v919
    %v921 = vrot.slane %v920, 2
    %v922 = vadd.f32 %v920, %v921
    %v923 = vrot.slane %v922, 1
    %v924 = vadd.f32 %v922, %v923
    %v925 = vrot.slane %v918, 4
    %v926 = vadd.f32 %v918, %v925
    %v927 = vrot.slane %v926, 2
    %v928 = vadd.f32 %v926, %v927
    %v929 = vrot.slane %v928, 1
    %v930 = vadd.f32 %v928, %v929
    %v931 = vmul.f32 %v924, %v314
    %v932 = vmul.f32 %v930, %v314
    %v933 = vmul.f32 %v915, %v915
    %v934 = vmul.f32 %v916, %v916
    %v935 = vsub.f32 %v931, %v933
    %v936 = vsub.f32 %v932, %v934
    %v937 = vmax.f32 %v935, 0.0
    %v938 = vmax.f32 %v936, 0.0
    %v939 = vadd.f32 %v937, 1e-05
    %v940 = vadd.f32 %v938, 1e-05
    %v941 = vrsqrt.pop %v939
    %v942 = vrsqrt.pop %v940
    %v943 = vsub.f32 %v897, %v915
    %v944 = vsub.f32 %v899, %v916
    %v946 = vlaneseq
    %v947 = vshrl.u32 %v946, 7
    %v948 = vsub.s32 0, %v947
    %v949 = vrot.slane %v90, %v948
    %v950 = vlaneseq
    %v951 = vshrl.u32 %v950, 7
    %v952 = vsub.s32 1, %v951
    %v953 = vrot.slane %v90, %v952
    %v956 = vmul.f32 %v949, %v943
    %v957 = vmul.f32 %v953, %v944
    %v958 = vmul.f32 %v956, %v941
    %v959 = vmul.f32 %v957, %v942
    %v961 = vlaneseq
    %v962 = vshrl.u32 %v961, 7
    %v963 = vsub.s32 0, %v962
    %v964 = vrot.slane %v92, %v963
    %v965 = vlaneseq
    %v966 = vshrl.u32 %v965, 7
    %v967 = vsub.s32 1, %v966
    %v968 = vrot.slane %v92, %v967
    %v971 = vadd.f32 %v958, %v964
    %v972 = vadd.f32 %v959, %v968
    %v973 = vmax.f32 %v971, 0.0
    %v974 = vmax.f32 %v972, 0.0
    %v975 = vpack.c.bf16 %v973, %v973
    %v976 = vpack.c.bf16 %v974, %v974
    %v977 = vld [vmem:[#allocation8] sm:$0xf]
    %v978 = vld [vmem:[#allocation8 + $0x4] sm:$0xf]
    %v979 = vld [vmem:[#allocation8 + $0x8] sm:$0xf]
    %v980 = vld [vmem:[#allocation8 + $0xc] sm:$0xf]
    %v981 = vld [vmem:[#allocation8 + $0x10] sm:$0xf]
    %v982 = vld [vmem:[#allocation8 + $0x14] sm:$0xf]
    %v983 = vld [vmem:[#allocation8 + $0x18] sm:$0xf]
    %v984 = vld [vmem:[#allocation8 + $0x1c] sm:$0xf]
    %v985 = vld [vmem:[#allocation8 + $0x20] sm:$0xf]
    %v986 = vld [vmem:[#allocation8 + $0x24] sm:$0xf]
    %v987 = vld [vmem:[#allocation8 + $0x28] sm:$0xf]
    %v988 = vld [vmem:[#allocation8 + $0x2c] sm:$0xf]
    %v989 = vld [vmem:[#allocation8 + $0x30] sm:$0xf]
    %v990 = vld [vmem:[#allocation8 + $0x34] sm:$0xf]
    %v991 = vld [vmem:[#allocation8 + $0x38] sm:$0xf]
    %v992 = vld [vmem:[#allocation8 + $0x3c] sm:$0xf]
    %v993 = vld [vmem:[#allocation8 + $0x40] sm:$0xf]
    %v994 = vld [vmem:[#allocation8 + $0x44] sm:$0xf]
    %v995 = vld [vmem:[#allocation8 + $0x48] sm:$0xf]
    %v996 = vld [vmem:[#allocation8 + $0x4c] sm:$0xf]
    %v997 = vld [vmem:[#allocation8 + $0x50] sm:$0xf]
    %v998 = vld [vmem:[#allocation8 + $0x54] sm:$0xf]
    %v999 = vld [vmem:[#allocation8 + $0x58] sm:$0xf]
    %v1000 = vld [vmem:[#allocation8 + $0x5c] sm:$0xf]
    %v1001 = vld [vmem:[#allocation8 + $0x60] sm:$0xf]
    %v1002 = vld [vmem:[#allocation8 + $0x64] sm:$0xf]
    %v1003 = vld [vmem:[#allocation8 + $0x68] sm:$0xf]
    %v1004 = vld [vmem:[#allocation8 + $0x6c] sm:$0xf]
    %v1005 = vld [vmem:[#allocation8 + $0x70] sm:$0xf]
    %v1006 = vld [vmem:[#allocation8 + $0x74] sm:$0xf]
    %v1007 = vld [vmem:[#allocation8 + $0x78] sm:$0xf]
    %v1008 = vld [vmem:[#allocation8 + $0x7c] sm:$0xf]
    %v1041 = vunpack.c.l.b16 %v977
    %v1042 = vunpack.c.l.b16 %v978
    %v1043 = vunpack.c.l.b16 %v979
    %v1044 = vunpack.c.l.b16 %v980
    %v1045 = vunpack.c.l.b16 %v981
    %v1046 = vunpack.c.l.b16 %v982
    %v1047 = vunpack.c.l.b16 %v983
    %v1048 = vunpack.c.l.b16 %v984
    %v1049 = vunpack.c.l.b16 %v985
    %v1050 = vunpack.c.l.b16 %v986
    %v1051 = vunpack.c.l.b16 %v987
    %v1052 = vunpack.c.l.b16 %v988
    %v1053 = vunpack.c.l.b16 %v989
    %v1054 = vunpack.c.l.b16 %v990
    %v1055 = vunpack.c.l.b16 %v991
    %v1056 = vunpack.c.l.b16 %v992
    %v1057 = vunpack.c.l.b16 %v993
    %v1058 = vunpack.c.l.b16 %v994
    %v1059 = vunpack.c.l.b16 %v995
    %v1060 = vunpack.c.l.b16 %v996
    %v1061 = vunpack.c.l.b16 %v997
    %v1062 = vunpack.c.l.b16 %v998
    %v1063 = vunpack.c.l.b16 %v999
    %v1064 = vunpack.c.l.b16 %v1000
    %v1065 = vunpack.c.l.b16 %v1001
    %v1066 = vunpack.c.l.b16 %v1002
    %v1067 = vunpack.c.l.b16 %v1003
    %v1068 = vunpack.c.l.b16 %v1004
    %v1069 = vunpack.c.l.b16 %v1005
    %v1070 = vunpack.c.l.b16 %v1006
    %v1071 = vunpack.c.l.b16 %v1007
    %v1072 = vunpack.c.l.b16 %v1008
    %v1073 = vpack.c.b16 %v1042, %v1041
    %v1074 = vpack.c.b16 %v1044, %v1043
    %v1075 = vpack.c.b16 %v1046, %v1045
    %v1076 = vpack.c.b16 %v1048, %v1047
    %v1077 = vpack.c.b16 %v1050, %v1049
    %v1078 = vpack.c.b16 %v1052, %v1051
    %v1079 = vpack.c.b16 %v1054, %v1053
    %v1080 = vpack.c.b16 %v1056, %v1055
    %v1081 = vpack.c.b16 %v1058, %v1057
    %v1082 = vpack.c.b16 %v1060, %v1059
    %v1083 = vpack.c.b16 %v1062, %v1061
    %v1084 = vpack.c.b16 %v1064, %v1063
    %v1085 = vpack.c.b16 %v1066, %v1065
    %v1086 = vpack.c.b16 %v1068, %v1067
    %v1087 = vpack.c.b16 %v1070, %v1069
    %v1088 = vpack.c.b16 %v1072, %v1071
    %1105 = vmatprep.subr.bf16.mxu0 0
    %1106 = vmatpush1.bf16.msra.mxu0 %v1073
    %1107 = vmatprep.subr.bf16.mxu0 0
    %1108 = vmatpush1.bf16.msra.mxu0 %v1074
    %1109 = vmatprep.subr.bf16.mxu0 0
    %1110 = vmatpush1.bf16.msra.mxu0 %v1075
    %1111 = vmatprep.subr.bf16.mxu0 0
    %1112 = vmatpush1.bf16.msra.mxu0 %v1076
    %1113 = vmatprep.subr.bf16.mxu0 0
    %1114 = vmatpush1.bf16.msra.mxu0 %v1077
    %1115 = vmatprep.subr.bf16.mxu0 0
    %1116 = vmatpush1.bf16.msra.mxu0 %v1078
    %1117 = vmatprep.subr.bf16.mxu0 0
    %1118 = vmatpush1.bf16.msra.mxu0 %v1079
    %1119 = vmatprep.subr.bf16.mxu0 0
    %1120 = vmatpush1.bf16.msra.mxu0 %v1080
    %1121 = vmatprep.subr.bf16.mxu0 0
    %1122 = vmatpush1.bf16.msra.mxu0 %v1081
    %1123 = vmatprep.subr.bf16.mxu0 0
    %1124 = vmatpush1.bf16.msra.mxu0 %v1082
    %1125 = vmatprep.subr.bf16.mxu0 0
    %1126 = vmatpush1.bf16.msra.mxu0 %v1083
    %1127 = vmatprep.subr.bf16.mxu0 0
    %1128 = vmatpush1.bf16.msra.mxu0 %v1084
    %1129 = vmatprep.subr.bf16.mxu0 0
    %1130 = vmatpush1.bf16.msra.mxu0 %v1085
    %1131 = vmatprep.subr.bf16.mxu0 0
    %1132 = vmatpush1.bf16.msra.mxu0 %v1086
    %1133 = vmatprep.subr.bf16.mxu0 0
    %1134 = vmatpush1.bf16.msra.mxu0 %v1087
    %1135 = vmatprep.subr.bf16.mxu0 0
    %1136 = vmatpush1.bf16.msra.mxu0 %v1088
    %1137 = vmatprep.mubr.bf16.mxu0 %v976
    %1138 = vmatmul.mubr.bf16.gmra.mrb[0].mxu0 %v975
    %v1139 = vpop.f32.mrb[0].mxu0
    %v1140 = vadd.f32 %v93, %v1139
    %v1141 = vpop.f32.mrb[0].mxu0
    %v1142 = vpop.f32.mrb[0].mxu0
    %v1143 = vpop.f32.mrb[0].mxu0
    %1144 = vdwg.mxu0
    %1145 = vst [vmem:[#allocation11] sm:$0xff] %v1140
    // Predicated region
    $region42: #{nba_mlp_forward.1} parent=1 // pred_check
      _
    $region43: #{nba_mlp_forward.1} parent=1 // pred_check_branch
      %1147 = sbr.rel (0) target = $region45
    $region44: #{nba_mlp_forward.1} parent=1 // pred_region
      %s1149 = ssub.s32 128, 128
      %1150 = vsyncadd [#allocation4], %s1149
      %s1152 = sshll.u32 [#allocation11], 4
      %s1153 = int_to_ptr.vmem [resolvable:$true] %s1152
      %1155 = dma.vmem_to_hbm [thread:$0]  %s1153, 128, %s5, [#allocation4]
    $region45: #{nba_mlp_forward.1} parent=1 // pred_fallthru
      _
    // Predicated region
    $region46: #{nba_mlp_forward.1} parent=1 // pred_check
      _
    $region47: #{nba_mlp_forward.1} parent=1 // pred_check_branch
      %1157 = sbr.rel (0) target = $region49
    $region48: #{nba_mlp_forward.1} parent=1 // pred_region
      %1158 = dma.done [#allocation4], 128
    $region49: #{nba_mlp_forward.1} parent=1 // pred_fallthru
      _
    %1159 = vsyncpa [#allocation3], 1
    %1160 = vsyncpa [#allocation6], 1
    %1161 = vsyncpa [#allocation9], 1
    %1162 = vsyncpa [#allocation4], 1

</llo_original>
